<compile_context>
chip_gen: v7x
topology: tpu7x:2x2x1
jax: 0.10.0
libtpu: 0.0.40
codegen_flags: <defaults>
</compile_context>

<pallas_src>
import functools
import math

import jax
import jax.numpy as jnp
from jax import lax
from jax.experimental import pallas as pl
from jax.experimental.pallas import tpu as pltpu


def attention_kernel(x_ref, wqkv_ref, wo_ref, o_ref, *, num_heads, d_head,
                     b_blk):
    """One block of `b_blk` batch elements per grid step.

    x_ref    : (b_blk, pos, d_model)
    wqkv_ref : (3*num_heads*d_head, d_model)   [W_Q; W_K; W_V], head-major rows
    wo_ref   : (d_model, num_heads*d_head)
    o_ref    : (b_blk, pos, d_model)
    """
    pos = x_ref.shape[1]
    d_model = x_ref.shape[2]
    f = num_heads * d_head

    wqkv = wqkv_ref[...]                               # (3f, d_model)
    wo = wo_ref[...]                                   # (d_model, f)
    x = x_ref[...].reshape(b_blk * pos, d_model)       # (rows, d_model)

    # Contract the LAST dim of both operands (A @ B^T, no transpose
    # materialized) / the FIRST dim of both operands (A^T @ B).
    dn_nt = (((1,), (1,)), ((), ()))
    dn_tn = (((0,), (0,)), ((), ()))

    # Single fused QKV projection, in (3f, rows) orientation: one MXU pass
    # with N = 3f, and every per-head slice below is a free sublane view.
    qkv = lax.dot_general(wqkv, x, dn_nt,
                          preferred_element_type=jnp.float32)
    qkv = qkv.astype(x.dtype)                          # (3f, b_blk*pos)

    # Causal mask and 1/sqrt(d_head) scale fused into one select.  Matches
    # the reference exactly: masked logits equal -1e10/sqrt(d_head), whose
    # exp underflows to 0, and the diagonal is never masked.
    row = lax.broadcasted_iota(jnp.int32, (pos, pos), 0)   # query index
    col = lax.broadcasted_iota(jnp.int32, (pos, pos), 1)   # key index
    causal = col <= row
    inv_sqrt_dh = jnp.float32(1.0 / math.sqrt(d_head))
    masked_val = jnp.float32(-1e10 / math.sqrt(d_head))

    z_rows = []
    for b in range(b_blk):                   # static unroll over batch block
        qkv_b = qkv if b_blk == 1 else qkv[:, b * pos:(b + 1) * pos]
        z_cols = []
        for h in range(num_heads):           # static unroll over heads
            lo = h * d_head
            qi = qkv_b[lo:lo + d_head, :]                    # (d_head, pos)
            ki = qkv_b[f + lo:f + lo + d_head, :]            # (d_head, pos)
            vi = qkv_b[2 * f + lo:2 * f + lo + d_head, :]    # (d_head, pos)

            # scores[q, p] = sum_h qi[h, q] * ki[h, p]
            scores = lax.dot_general(qi, ki, dn_tn,
                                     preferred_element_type=jnp.float32)
            logits = jnp.where(causal, scores * inv_sqrt_dh, masked_val)

            m = jnp.max(logits, axis=-1, keepdims=True)
            e = jnp.exp(logits - m)                          # (pos, pos) f32
            denom = jnp.sum(e, axis=-1, keepdims=True)       # (pos, 1)

            # z_i[q, h] = sum_p attn[q, p] * vi[h, p]; softmax normalization
            # deferred to the smaller (pos, d_head) result.
            zi = lax.dot_general(e.astype(vi.dtype), vi, dn_nt,
                                 preferred_element_type=jnp.float32)
            z_cols.append(zi / denom)

        # Head-major concat == rearrange 'b i q h -> b q (i h)'.
        z_rows.append(jnp.concatenate(z_cols, axis=-1))      # (pos, f)

    # Single output projection for the whole batch block (one MXU op, K = f).
    z = jnp.concatenate(z_rows, axis=0).astype(wo.dtype)     # (rows, f)
    out = lax.dot_general(z, wo, dn_nt,
                          preferred_element_type=jnp.float32)  # (rows, d_model)

    # TODO(synk): for d_model < 128 a lane-dense (b_blk, pos*d_model) output
    # slab (reshaped back in the wrapper) would replace these 32-lane masked
    # stores with full-width ones; kept the natural layout here for robustness.
    o_ref[...] = out.reshape(b_blk, pos, d_model).astype(o_ref.dtype)


def attention_forward(x, W_Q, W_K, W_V, W_O):
    """x: (batch, pos, d_model); W_{Q,K,V}: (num_heads, d_head, d_model);
    W_O: (d_model, num_heads*d_head).  Returns (batch, pos, d_model)."""
    batch, pos, d_model = x.shape
    num_heads, d_head, _ = W_Q.shape
    f = num_heads * d_head

    # Fused QKV weight: head-major flatten (pure, memory-order-preserving
    # reshapes) + one concat, done once in the wrapper.
    w_qkv = jnp.concatenate(
        [W_Q.reshape(f, d_model),
         W_K.reshape(f, d_model),
         W_V.reshape(f, d_model)], axis=0)               # (3f, d_model)

    # Batch blocking: fill the MXU's M dimension (~256 rows on v6e/v7x) while
    # keeping >= 2 grid steps so v7x can shard batch blocks across its two
    # TensorCores; b_blk must divide batch exactly.
    b_blk = max(1, min(batch, 256 // max(pos, 1)))
    if batch > 1:
        b_blk = min(b_blk, pl.cdiv(batch, 2))
    while batch % b_blk:
        b_blk -= 1
    grid = (batch // b_blk,)

    kernel = functools.partial(attention_kernel, num_heads=num_heads,
                               d_head=d_head, b_blk=b_blk)

    # TODO(synk): for long sequences, tile `pos` with an online (flash-style)
    # softmax and set vmem_limit_bytes explicitly (v7x has only 64 MiB VMEM);
    # at these model sizes one batch block fits comfortably in VMEM.
    return pl.pallas_call(
        kernel,
        out_shape=jax.ShapeDtypeStruct((batch, pos, d_model), x.dtype),
        grid_spec=pltpu.PrefetchScalarGridSpec(
            num_scalar_prefetch=0,
            grid=grid,
            in_specs=[
                pl.BlockSpec((b_blk, pos, d_model), lambda b: (b, 0, 0)),
                # Constant index_maps: weights stay VMEM-resident across the
                # whole grid (fetched once).
                pl.BlockSpec((3 * f, d_model), lambda b: (0, 0)),
                pl.BlockSpec((d_model, f), lambda b: (0, 0)),
            ],
            out_specs=pl.BlockSpec((b_blk, pos, d_model), lambda b: (b, 0, 0)),
        ),
        compiler_params=pltpu.CompilerParams(
            dimension_semantics=("parallel",),   # batch blocks independent
        ),
    )(x, w_qkv, W_O)


def attention_reference(x, W_Q, W_K, W_V, W_O, d_head):
    """Pure-JAX mirror of the PyTorch forward (f32-accurate einsums)."""
    hp = lax.Precision.HIGHEST
    k = jnp.einsum('ihd,bpd->biph', W_K, x, precision=hp)
    q = jnp.einsum('ihd,bpd->biph', W_Q, x, precision=hp)
    v = jnp.einsum('ihd,bpd->biph', W_V, x, precision=hp)
    scores = jnp.einsum('biph,biqh->biqp', k, q, precision=hp)
    pos = x.shape[1]
    mask = jnp.tril(jnp.ones((pos, pos), jnp.float32))
    masked = jnp.tril(scores) - 1e10 * (1.0 - mask)
    attn = jax.nn.softmax(masked / math.sqrt(d_head), axis=-1)
    z = jnp.einsum('biph,biqp->biqh', v, attn, precision=hp)
    b, i, qp, h = z.shape
    z_flat = jnp.transpose(z, (0, 2, 1, 3)).reshape(b, qp, i * h)
    return jnp.einsum('df,bqf->bqd', W_O, z_flat, precision=hp)


if __name__ == "__main__":
    # Small shapes consistent with the module.
    batch = 2
    pos = 8          # == n_ctx
    d_model = 32
    num_heads = 4
    d_head = 8

    key = jax.random.PRNGKey(0)
    k_q, k_k, k_v, k_o, k_x = jax.random.split(key, 5)

    inv_sqrt_dm = 1.0 / math.sqrt(d_model)
    W_Q = jax.random.normal(k_q, (num_heads, d_head, d_model), jnp.float32) * inv_sqrt_dm
    W_K = jax.random.normal(k_k, (num_heads, d_head, d_model), jnp.float32) * inv_sqrt_dm
    W_V = jax.random.normal(k_v, (num_heads, d_head, d_model), jnp.float32) * inv_sqrt_dm
    W_O = jax.random.normal(k_o, (d_model, num_heads * d_head), jnp.float32) * inv_sqrt_dm
    x = jax.random.normal(k_x, (batch, pos, d_model), jnp.float32)

    out = attention_forward(x, W_Q, W_K, W_V, W_O)
    out = jax.block_until_ready(out)

    ref = attention_reference(x, W_Q, W_K, W_V, W_O, d_head)
    assert out.shape == (batch, pos, d_model), out.shape

    # Tolerance leaves headroom for backends that lower f32 matmuls through
    # bf16 MXU passes at default precision; typical observed error is ~1e-6.
    max_err = float(jnp.max(jnp.abs(out - ref)))
    assert jnp.allclose(out, ref, rtol=1e-2, atol=1e-2), (
        f"mismatch vs reference attention: max abs err {max_err}")

    print("KERNEL_OK")
</pallas_src>

<mosaic_0001>
module attributes {stable_mosaic.version = 11 : i64} {
  func.func @attention_kernel(%arg0: i32, %arg1: memref<1x8x32xf32, #tpu.memory_space<vmem>>, %arg2: memref<96x32xf32, #tpu.memory_space<vmem>>, %arg3: memref<32x32xf32, #tpu.memory_space<vmem>>, %arg4: memref<1x8x32xf32, #tpu.memory_space<vmem>>) attributes {dimension_semantics = [#tpu.dimension_semantics<parallel>], iteration_bounds = array<i64: 2>, scalar_prefetch = 0 : i64, scratch_operands = 0 : i64, tpu.core_type = #tpu.core_type<tc>, window_params = [{transform_indices = @transform_0, window_bounds = array<i64: 1, 8, 32>}, {pipeline_mode = #tpu.pipeline_mode<synchronous>, transform_indices = @transform_1, window_bounds = array<i64: 96, 32>}, {pipeline_mode = #tpu.pipeline_mode<synchronous>, transform_indices = @transform_2, window_bounds = array<i64: 32, 32>}, {transform_indices = @transform_3, window_bounds = array<i64: 1, 8, 32>}]} {
    %c0 = arith.constant 0 : index
    %c0_0 = arith.constant 0 : index
    %0 = vector.load %arg2[%c0, %c0_0] : memref<96x32xf32, #tpu.memory_space<vmem>>, vector<96x32xf32>
    %c0_1 = arith.constant 0 : index
    %c0_2 = arith.constant 0 : index
    %1 = vector.load %arg3[%c0_1, %c0_2] : memref<32x32xf32, #tpu.memory_space<vmem>>, vector<32x32xf32>
    %c0_3 = arith.constant 0 : index
    %c0_4 = arith.constant 0 : index
    %c0_5 = arith.constant 0 : index
    %2 = vector.load %arg1[%c0_3, %c0_4, %c0_5] : memref<1x8x32xf32, #tpu.memory_space<vmem>>, vector<1x8x32xf32>
    %3 = vector.shape_cast %2 : vector<1x8x32xf32> to vector<8x32xf32>
    %cst = arith.constant dense<0.000000e+00> : vector<96x8xf32>
    %4 = tpu.matmul %0, %3, %cst {dimension_numbers = #tpu.dot_dimension_numbers<[1], [1], [0], [0], [0, 0, 1, 0], [], []>} : vector<96x32xf32>, vector<8x32xf32>, vector<96x8xf32> -> vector<96x8xf32>
    %5 = tpu.iota {dimensions = array<i32: 0>} : vector<8x8xi32>
    %6 = tpu.iota {dimensions = array<i32: 1>} : vector<8x8xi32>
    %7 = arith.cmpi sle, %6, %5 : vector<8x8xi32>
    %8 = vector.extract_strided_slice %4 {offsets = [0, 0], sizes = [8, 8], strides = [1, 1]} : vector<96x8xf32> to vector<8x8xf32>
    %9 = vector.extract_strided_slice %4 {offsets = [32, 0], sizes = [8, 8], strides = [1, 1]} : vector<96x8xf32> to vector<8x8xf32>
    %10 = vector.extract_strided_slice %4 {offsets = [64, 0], sizes = [8, 8], strides = [1, 1]} : vector<96x8xf32> to vector<8x8xf32>
    %cst_6 = arith.constant dense<0.000000e+00> : vector<8x8xf32>
    %11 = tpu.matmul %8, %9, %cst_6 {dimension_numbers = #tpu.dot_dimension_numbers<[0], [0], [1], [1], [0, 1, 1, 1], [], []>} : vector<8x8xf32>, vector<8x8xf32>, vector<8x8xf32> -> vector<8x8xf32>
    %cst_7 = arith.constant 0.353553385 : f32
    %12 = vector.broadcast %cst_7 : f32 to vector<8x8xf32>
    %13 = arith.mulf %11, %12 : vector<8x8xf32>
    %cst_8 = arith.constant -3.53553382E+9 : f32
    %14 = vector.broadcast %cst_8 : f32 to vector<8x8xf32>
    %15 = arith.select %7, %13, %14 : vector<8x8xi1>, vector<8x8xf32>
    %cst_9 = arith.constant dense<0xFF800000> : vector<8xf32>
    %16 = vector.multi_reduction <maximumf>, %15, %cst_9 [1] : vector<8x8xf32> to vector<8xf32>
    %17 = vector.shape_cast %16 : vector<8xf32> to vector<8x1xf32>
    %18 = vector.broadcast %17 : vector<8x1xf32> to vector<8x8xf32>
    %19 = arith.subf %15, %18 : vector<8x8xf32>
    %20 = math.exp %19 : vector<8x8xf32>
    %cst_10 = arith.constant dense<0.000000e+00> : vector<8xf32>
    %21 = vector.multi_reduction <add>, %20, %cst_10 [1] : vector<8x8xf32> to vector<8xf32>
    %22 = vector.shape_cast %21 : vector<8xf32> to vector<8x1xf32>
    %cst_11 = arith.constant dense<0.000000e+00> : vector<8x8xf32>
    %23 = tpu.matmul %20, %10, %cst_11 {dimension_numbers = #tpu.dot_dimension_numbers<[1], [1], [0], [0], [0, 0, 1, 0], [], []>} : vector<8x8xf32>, vector<8x8xf32>, vector<8x8xf32> -> vector<8x8xf32>
    %24 = vector.broadcast %22 : vector<8x1xf32> to vector<8x8xf32>
    %25 = arith.divf %23, %24 : vector<8x8xf32>
    %26 = vector.extract_strided_slice %4 {offsets = [8, 0], sizes = [8, 8], strides = [1, 1]} : vector<96x8xf32> to vector<8x8xf32>
    %27 = vector.extract_strided_slice %4 {offsets = [40, 0], sizes = [8, 8], strides = [1, 1]} : vector<96x8xf32> to vector<8x8xf32>
    %28 = vector.extract_strided_slice %4 {offsets = [72, 0], sizes = [8, 8], strides = [1, 1]} : vector<96x8xf32> to vector<8x8xf32>
    %cst_12 = arith.constant dense<0.000000e+00> : vector<8x8xf32>
    %29 = tpu.matmul %26, %27, %cst_12 {dimension_numbers = #tpu.dot_dimension_numbers<[0], [0], [1], [1], [0, 1, 1, 1], [], []>} : vector<8x8xf32>, vector<8x8xf32>, vector<8x8xf32> -> vector<8x8xf32>
    %cst_13 = arith.constant 0.353553385 : f32
    %30 = vector.broadcast %cst_13 : f32 to vector<8x8xf32>
    %31 = arith.mulf %29, %30 : vector<8x8xf32>
    %cst_14 = arith.constant -3.53553382E+9 : f32
    %32 = vector.broadcast %cst_14 : f32 to vector<8x8xf32>
    %33 = arith.select %7, %31, %32 : vector<8x8xi1>, vector<8x8xf32>
    %cst_15 = arith.constant dense<0xFF800000> : vector<8xf32>
    %34 = vector.multi_reduction <maximumf>, %33, %cst_15 [1] : vector<8x8xf32> to vector<8xf32>
    %35 = vector.shape_cast %34 : vector<8xf32> to vector<8x1xf32>
    %36 = vector.broadcast %35 : vector<8x1xf32> to vector<8x8xf32>
    %37 = arith.subf %33, %36 : vector<8x8xf32>
    %38 = math.exp %37 : vector<8x8xf32>
    %cst_16 = arith.constant dense<0.000000e+00> : vector<8xf32>
    %39 = vector.multi_reduction <add>, %38, %cst_16 [1] : vector<8x8xf32> to vector<8xf32>
    %40 = vector.shape_cast %39 : vector<8xf32> to vector<8x1xf32>
    %cst_17 = arith.constant dense<0.000000e+00> : vector<8x8xf32>
    %41 = tpu.matmul %38, %28, %cst_17 {dimension_numbers = #tpu.dot_dimension_numbers<[1], [1], [0], [0], [0, 0, 1, 0], [], []>} : vector<8x8xf32>, vector<8x8xf32>, vector<8x8xf32> -> vector<8x8xf32>
    %42 = vector.broadcast %40 : vector<8x1xf32> to vector<8x8xf32>
    %43 = arith.divf %41, %42 : vector<8x8xf32>
    %44 = vector.extract_strided_slice %4 {offsets = [16, 0], sizes = [8, 8], strides = [1, 1]} : vector<96x8xf32> to vector<8x8xf32>
    %45 = vector.extract_strided_slice %4 {offsets = [48, 0], sizes = [8, 8], strides = [1, 1]} : vector<96x8xf32> to vector<8x8xf32>
    %46 = vector.extract_strided_slice %4 {offsets = [80, 0], sizes = [8, 8], strides = [1, 1]} : vector<96x8xf32> to vector<8x8xf32>
    %cst_18 = arith.constant dense<0.000000e+00> : vector<8x8xf32>
    %47 = tpu.matmul %44, %45, %cst_18 {dimension_numbers = #tpu.dot_dimension_numbers<[0], [0], [1], [1], [0, 1, 1, 1], [], []>} : vector<8x8xf32>, vector<8x8xf32>, vector<8x8xf32> -> vector<8x8xf32>
    %cst_19 = arith.constant 0.353553385 : f32
    %48 = vector.broadcast %cst_19 : f32 to vector<8x8xf32>
    %49 = arith.mulf %47, %48 : vector<8x8xf32>
    %cst_20 = arith.constant -3.53553382E+9 : f32
    %50 = vector.broadcast %cst_20 : f32 to vector<8x8xf32>
    %51 = arith.select %7, %49, %50 : vector<8x8xi1>, vector<8x8xf32>
    %cst_21 = arith.constant dense<0xFF800000> : vector<8xf32>
    %52 = vector.multi_reduction <maximumf>, %51, %cst_21 [1] : vector<8x8xf32> to vector<8xf32>
    %53 = vector.shape_cast %52 : vector<8xf32> to vector<8x1xf32>
    %54 = vector.broadcast %53 : vector<8x1xf32> to vector<8x8xf32>
    %55 = arith.subf %51, %54 : vector<8x8xf32>
    %56 = math.exp %55 : vector<8x8xf32>
    %cst_22 = arith.constant dense<0.000000e+00> : vector<8xf32>
    %57 = vector.multi_reduction <add>, %56, %cst_22 [1] : vector<8x8xf32> to vector<8xf32>
    %58 = vector.shape_cast %57 : vector<8xf32> to vector<8x1xf32>
    %cst_23 = arith.constant dense<0.000000e+00> : vector<8x8xf32>
    %59 = tpu.matmul %56, %46, %cst_23 {dimension_numbers = #tpu.dot_dimension_numbers<[1], [1], [0], [0], [0, 0, 1, 0], [], []>} : vector<8x8xf32>, vector<8x8xf32>, vector<8x8xf32> -> vector<8x8xf32>
    %60 = vector.broadcast %58 : vector<8x1xf32> to vector<8x8xf32>
    %61 = arith.divf %59, %60 : vector<8x8xf32>
    %62 = vector.extract_strided_slice %4 {offsets = [24, 0], sizes = [8, 8], strides = [1, 1]} : vector<96x8xf32> to vector<8x8xf32>
    %63 = vector.extract_strided_slice %4 {offsets = [56, 0], sizes = [8, 8], strides = [1, 1]} : vector<96x8xf32> to vector<8x8xf32>
    %64 = vector.extract_strided_slice %4 {offsets = [88, 0], sizes = [8, 8], strides = [1, 1]} : vector<96x8xf32> to vector<8x8xf32>
    %cst_24 = arith.constant dense<0.000000e+00> : vector<8x8xf32>
    %65 = tpu.matmul %62, %63, %cst_24 {dimension_numbers = #tpu.dot_dimension_numbers<[0], [0], [1], [1], [0, 1, 1, 1], [], []>} : vector<8x8xf32>, vector<8x8xf32>, vector<8x8xf32> -> vector<8x8xf32>
    %cst_25 = arith.constant 0.353553385 : f32
    %66 = vector.broadcast %cst_25 : f32 to vector<8x8xf32>
    %67 = arith.mulf %65, %66 : vector<8x8xf32>
    %cst_26 = arith.constant -3.53553382E+9 : f32
    %68 = vector.broadcast %cst_26 : f32 to vector<8x8xf32>
    %69 = arith.select %7, %67, %68 : vector<8x8xi1>, vector<8x8xf32>
    %cst_27 = arith.constant dense<0xFF800000> : vector<8xf32>
    %70 = vector.multi_reduction <maximumf>, %69, %cst_27 [1] : vector<8x8xf32> to vector<8xf32>
    %71 = vector.shape_cast %70 : vector<8xf32> to vector<8x1xf32>
    %72 = vector.broadcast %71 : vector<8x1xf32> to vector<8x8xf32>
    %73 = arith.subf %69, %72 : vector<8x8xf32>
    %74 = math.exp %73 : vector<8x8xf32>
    %cst_28 = arith.constant dense<0.000000e+00> : vector<8xf32>
    %75 = vector.multi_reduction <add>, %74, %cst_28 [1] : vector<8x8xf32> to vector<8xf32>
    %76 = vector.shape_cast %75 : vector<8xf32> to vector<8x1xf32>
    %cst_29 = arith.constant dense<0.000000e+00> : vector<8x8xf32>
    %77 = tpu.matmul %74, %64, %cst_29 {dimension_numbers = #tpu.dot_dimension_numbers<[1], [1], [0], [0], [0, 0, 1, 0], [], []>} : vector<8x8xf32>, vector<8x8xf32>, vector<8x8xf32> -> vector<8x8xf32>
    %78 = vector.broadcast %76 : vector<8x1xf32> to vector<8x8xf32>
    %79 = arith.divf %77, %78 : vector<8x8xf32>
    %80 = tpu.concatenate %25, %43, %61, %79 in 1 : vector<8x8xf32>, vector<8x8xf32>, vector<8x8xf32>, vector<8x8xf32> -> vector<8x32xf32>
    %cst_30 = arith.constant dense<0.000000e+00> : vector<8x32xf32>
    %81 = tpu.matmul %80, %1, %cst_30 {dimension_numbers = #tpu.dot_dimension_numbers<[1], [1], [0], [0], [0, 0, 1, 0], [], []>} : vector<8x32xf32>, vector<32x32xf32>, vector<8x32xf32> -> vector<8x32xf32>
    %82 = vector.shape_cast %81 : vector<8x32xf32> to vector<1x8x32xf32>
    %c0_31 = arith.constant 0 : index
    %c0_32 = arith.constant 0 : index
    %c0_33 = arith.constant 0 : index
    %83 = vector.load %arg4[%c0_31, %c0_32, %c0_33] : memref<1x8x32xf32, #tpu.memory_space<vmem>>, vector<1x8x32xf32>
    tpu.vector_store %arg4[%c0_31, %c0_32, %c0_33], %82 {strides = array<i32>} : memref<1x8x32xf32, #tpu.memory_space<vmem>>, vector<1x8x32xf32>,
    return
  }
  func.func @transform_0(%arg0: i32) -> (i32, i32, i32) {
    %c0_i32 = arith.constant 0 : i32
    %c0_i32_0 = arith.constant 0 : i32
    %c0_i32_1 = arith.constant 0 : i32
    return %arg0, %c0_i32, %c0_i32_0 : i32, i32, i32
  }
  func.func @transform_1(%arg0: i32) -> (i32, i32) {
    %c0_i32 = arith.constant 0 : i32
    %c0_i32_0 = arith.constant 0 : i32
    %c0_i32_1 = arith.constant 0 : i32
    return %c0_i32, %c0_i32_0 : i32, i32
  }
  func.func @transform_2(%arg0: i32) -> (i32, i32) {
    %c0_i32 = arith.constant 0 : i32
    %c0_i32_0 = arith.constant 0 : i32
    %c0_i32_1 = arith.constant 0 : i32
    return %c0_i32, %c0_i32_0 : i32, i32
  }
  func.func @transform_3(%arg0: i32) -> (i32, i32, i32) {
    %c0_i32 = arith.constant 0 : i32
    %c0_i32_0 = arith.constant 0 : i32
    %c0_i32_1 = arith.constant 0 : i32
    return %arg0, %c0_i32, %c0_i32_0 : i32, i32, i32
  }
}

</mosaic_0001>

<llo_original>
// kernel: tpu_custom_call.1
$region0: #{tpu_custom_call.1}
  #allocation0 [shape = 'u32[]', space=smem, size = 0x4, offset = 0x4, fixed_abs, tag = 'smem constant byte address 0x4 - core index']
  #allocation1 [shape = 'u32[144,128]{1,0:T(1,128)}', space=vmem, size = 0x12000, scoped, tag = 'internal scratch']
  %s0 = inlined_call_operand.vmem [shape: f32[2,8,32], index: 0, kind: input, shape index: {}]
  %s1 = inlined_call_operand.vmem [shape: f32[96,32], index: 1, kind: input, shape index: {}]
  %s2 = inlined_call_operand.vmem [shape: f32[32,32], index: 2, kind: input, shape index: {}]
  %s3 = inlined_call_operand.hbm [shape: f32[2,8,32], index: 3, kind: output, shape index: {}]
  %s4 = sld [smem:[#allocation0]]
  $region45: #{tpu_custom_call.1} parent=0
    _
  %s6 = ssub.s32 1, %s4
  %s7 = scalar_select 0, %s6, %s4
  $region1: #{tpu_custom_call.1} parent=0
    #allocation2 [shape = 'u8[8192]{0}', space=vmem, size = 0x2000, scoped, tag = 'output window, operand 0']
    #allocation3 [shape = 's32[2]{0}', space=sflag, size = 0x8, scoped, tag = 'scoped memory for tpu_custom_call.1']
    %8 = vsyncpa [#allocation3], 0
    %s9 = scalar_lea.sflag [#allocation3], 1
    %10 = vsyncpa %s9, 0
    loop: start=0, step=1, limit=4
    $region2: #{tpu_custom_call.1} parent=1 // loop_pre_header
      _
    $region3: #{tpu_custom_call.1} parent=1 // loop_header
      %s12 = sphi 0, %s16
      %p13 = scmp.ge.s32.totalorder %s12, 4
      %s22 = sphi 0, %s24
      %s25 = sphi 0, %s22
      %s26 = sphi 0, %s25
      %s42 = sphi 0, %s26
      %s46 = sphi 0, %s46
      %s48 = sphi 0, %s46
      %s49 = sphi 0, %s48
      %s63 = sphi 0, %s49
      %s67 = sphi 0, %s67
      %s69 = sphi 0, %s67
      %s70 = sphi 0, %s69
      %s84 = sphi 0, %s70
      %s90 = sphi 0, %s92
      %s93 = sphi 0, %s90
      %s94 = sphi 0, %s93
      %s110 = sphi 0, %s94
    $region4: #{tpu_custom_call.1} parent=1 // loop_header_branch
      %15 = sbr.rel (%p13) target = $region8
    $region5: #{tpu_custom_call.1} parent=1 // loop_body
      %s17 = ssub.s32 %s12, 1
      %s18 = ssub.s32 %s12, 2
      %s19 = sadd.s32 %s12, 1
      %s20 = ssub.s32 %s12, %s19
      %p21 = scmp.eq.s32.totalorder %s20, 0
      %s23 = sadd.s32 %s22, 1
      %s24 = scalar_select %p21, %s22, %s23
      %p27 = pneg %p21
      %p28 = scmp.eq.s32.totalorder %s12, 1
      %p29 = por %p27, %p28
      %p30 = scmp.ne.s32.totalorder %s22, %s25
      %p31 = scmp.eq.s32.totalorder %s12, 0
      %p32 = por %p30, %p31
      %p33 = scmp.ne.s32.totalorder %s22, %s25
      %p34 = scmp.eq.s32.totalorder %s17, 1
      %p35 = por %p33, %p34
      %p36 = scmp.ne.s32.totalorder %s25, %s26
      %p37 = scmp.eq.s32.totalorder %s17, 0
      %p38 = por %p36, %p37
      %p39 = scmp.ne.s32.totalorder %s25, %s26
      %p40 = scmp.eq.s32.totalorder %s18, 1
      %p41 = por %p39, %p40
      %p43 = scmp.ne.s32.totalorder %s26, %s42
      %p44 = scmp.eq.s32.totalorder %s18, 0
      %p45 = por %p43, %p44
      %s47 = sadd.s32 %s46, 1
      %p50 = scmp.eq.s32.totalorder %s12, 1
      %p51 = scmp.ne.s32.totalorder %s46, %s48
      %p52 = scmp.eq.s32.totalorder %s12, 0
      %p53 = por %p51, %p52
      %p54 = scmp.ne.s32.totalorder %s46, %s48
      %p55 = scmp.eq.s32.totalorder %s17, 1
      %p56 = por %p54, %p55
      %p57 = scmp.ne.s32.totalorder %s48, %s49
      %p58 = scmp.eq.s32.totalorder %s17, 0
      %p59 = por %p57, %p58
      %p60 = scmp.ne.s32.totalorder %s48, %s49
      %p61 = scmp.eq.s32.totalorder %s18, 1
      %p62 = por %p60, %p61
      %p64 = scmp.ne.s32.totalorder %s49, %s63
      %p65 = scmp.eq.s32.totalorder %s18, 0
      %p66 = por %p64, %p65
      %s68 = sadd.s32 %s67, 1
      %p71 = scmp.eq.s32.totalorder %s12, 1
      %p72 = scmp.ne.s32.totalorder %s67, %s69
      %p73 = scmp.eq.s32.totalorder %s12, 0
      %p74 = por %p72, %p73
      %p75 = scmp.ne.s32.totalorder %s67, %s69
      %p76 = scmp.eq.s32.totalorder %s17, 1
      %p77 = por %p75, %p76
      %p78 = scmp.ne.s32.totalorder %s69, %s70
      %p79 = scmp.eq.s32.totalorder %s17, 0
      %p80 = por %p78, %p79
      %p81 = scmp.ne.s32.totalorder %s69, %s70
      %p82 = scmp.eq.s32.totalorder %s18, 1
      %p83 = por %p81, %p82
      %p85 = scmp.ne.s32.totalorder %s70, %s84
      %p86 = scmp.eq.s32.totalorder %s18, 0
      %p87 = por %p85, %p86
      %s88 = ssub.s32 %s12, %s19
      %p89 = scmp.eq.s32.totalorder %s88, 0
      %s91 = sadd.s32 %s90, 1
      %s92 = scalar_select %p89, %s90, %s91
      %p95 = pneg %p89
      %p96 = scmp.eq.s32.totalorder %s12, 1
      %p97 = por %p95, %p96
      %p98 = scmp.ne.s32.totalorder %s90, %s93
      %p99 = scmp.eq.s32.totalorder %s12, 0
      %p100 = por %p98, %p99
      %p101 = scmp.ne.s32.totalorder %s90, %s93
      %p102 = scmp.eq.s32.totalorder %s17, 1
      %p103 = por %p101, %p102
      %p104 = scmp.ne.s32.totalorder %s93, %s94
      %p105 = scmp.eq.s32.totalorder %s17, 0
      %p106 = por %p104, %p105
      %p107 = scmp.ne.s32.totalorder %s93, %s94
      %p108 = scmp.eq.s32.totalorder %s18, 1
      %p109 = por %p107, %p108
      %p111 = scmp.ne.s32.totalorder %s94, %s110
      %p112 = scmp.eq.s32.totalorder %s18, 0
      %p113 = por %p111, %p112
      %p114 = scmp.le.s32.totalorder 1, %s12
      %p115 = scmp.lt.s32.totalorder %s12, 3
      %p116 = pnand %p114, %p115
      %p117 = pneg %p116
      // Predicated region
      $region9: #{tpu_custom_call.1} parent=5 // pred_check
        _
      $region10: #{tpu_custom_call.1} parent=5 // pred_check_branch
        %119 = sbr.rel (%p116) target = $region12
      $region11: #{tpu_custom_call.1} parent=5 // pred_region
        %s120 = ssub.s32 %s12, 1
        // Predicated region
        $region13: #{tpu_custom_call.1} parent=11 // pred_check
          %p121 = pneg %p59
        $region14: #{tpu_custom_call.1} parent=11 // pred_check_branch
          %123 = sbr.rel (%p121) target = $region16
        $region15: #{tpu_custom_call.1} parent=11 // pred_region
          _
        $region16: #{tpu_custom_call.1} parent=11 // pred_fallthru
          _
        // Predicated region
        $region17: #{tpu_custom_call.1} parent=11 // pred_check
          %p124 = pneg %p80
        $region18: #{tpu_custom_call.1} parent=11 // pred_check_branch
          %126 = sbr.rel (%p124) target = $region20
        $region19: #{tpu_custom_call.1} parent=11 // pred_region
          _
        $region20: #{tpu_custom_call.1} parent=11 // pred_fallthru
          _
      $region12: #{tpu_custom_call.1} parent=5 // pred_fallthru
        _
      %p127 = scmp.lt.s32.totalorder %s12, 2
      // Predicated region
      $region21: #{tpu_custom_call.1} parent=5 // pred_check
        %p128 = pneg %p127
      $region22: #{tpu_custom_call.1} parent=5 // pred_check_branch
        %130 = sbr.rel (%p128) target = $region24
      $region23: #{tpu_custom_call.1} parent=5 // pred_region
        // Predicated region
        $region25: #{tpu_custom_call.1} parent=23 // pred_check
          %p131 = pneg %p32
        $region26: #{tpu_custom_call.1} parent=23 // pred_check_branch
          %133 = sbr.rel (%p131) target = $region28
        $region27: #{tpu_custom_call.1} parent=23 // pred_region
          %p134 = scmp.lt.s32.totalorder %s12, 1
          %s135 = scalar_select %p134, %s12, 1
          %s136 = smul.addr %s135, 8
          %s137 = scalar_lea.vmem %s0, %s136
        $region28: #{tpu_custom_call.1} parent=23 // pred_fallthru
          _
      $region24: #{tpu_custom_call.1} parent=5 // pred_fallthru
        _
      %p138 = scmp.le.s32.totalorder 1, %s12
      %p139 = scmp.lt.s32.totalorder %s12, 3
      %p140 = pnand %p138, %p139
      %p141 = pneg %p140
      // Predicated region
      $region29: #{tpu_custom_call.1} parent=5 // pred_check
        _
      $region30: #{tpu_custom_call.1} parent=5 // pred_check_branch
        %143 = sbr.rel (%p140) target = $region32
      $region31: #{tpu_custom_call.1} parent=5 // pred_region
        %s144 = ssub.s32 %s12, 1
        %p145 = scmp.lt.s32.totalorder %s17, 1
        %s146 = scalar_select %p145, %s17, 1
        %s147 = smul.addr %s146, 8
        %s148 = scalar_lea.vmem %s0, %s147
        %p149 = pneg %p38
        %p150 = pneg %p35
        %p151 = pneg %p59
        %p152 = pneg %p56
        %p153 = pneg %p80
        %p154 = pneg %p77
        %p155 = pneg %p106
        %p156 = pneg %p103
        %s157 = sand.u32 %s93, 1
        %s158 = scalar_lea.sflag [#allocation3], %s157
        %s159 = sand.u32 %s93, 1
        %s160 = smul.addr %s159, 8
        %s161 = scalar_lea.vmem [#allocation2], %s160
        %p162 = scmp.lt.s32.totalorder %s17, 1
        %s163 = scalar_select %p162, %s17, 1
        %s164 = smul.addr %s163, 8
        %s165 = scalar_lea.vmem %s0, %s164
        %v166 = vld [vmem:[%s1] sm:$0xff]
        %v167 = vld [vmem:[%s1 + $0x8] sm:$0xff]
        %v168 = vld [vmem:[%s1 + $0x10] sm:$0xff]
        %v169 = vld [vmem:[%s1 + $0x18] sm:$0xff]
        %v170 = vld [vmem:[%s1 + $0x20] sm:$0xff]
        %v171 = vld [vmem:[%s1 + $0x28] sm:$0xff]
        %v172 = vld [vmem:[%s1 + $0x30] sm:$0xff]
        %v173 = vld [vmem:[%s1 + $0x38] sm:$0xff]
        %v174 = vld [vmem:[%s1 + $0x40] sm:$0xff]
        %v175 = vld [vmem:[%s1 + $0x48] sm:$0xff]
        %v176 = vld [vmem:[%s1 + $0x50] sm:$0xff]
        %v177 = vld [vmem:[%s1 + $0x58] sm:$0xff]
        %v178 = vld [vmem:[%s2] sm:$0xff]
        %v179 = vld [vmem:[%s2 + $0x8] sm:$0xff]
        %v180 = vld [vmem:[%s2 + $0x10] sm:$0xff]
        %v181 = vld [vmem:[%s2 + $0x18] sm:$0xff]
        %v182 = vld [vmem:[%s165] sm:$0xff]
        %vm183 = vcmask 261120
        %v185 = vsel %vm183, %v166, 0
        %v188 = vsel %vm183, %v167, 0
        %v191 = vsel %vm183, %v168, 0
        %v194 = vsel %vm183, %v169, 0
        %v197 = vsel %vm183, %v170, 0
        %v200 = vsel %vm183, %v171, 0
        %v203 = vsel %vm183, %v172, 0
        %v206 = vsel %vm183, %v173, 0
        %v209 = vsel %vm183, %v174, 0
        %v212 = vsel %vm183, %v175, 0
        %v215 = vsel %vm183, %v176, 0
        %v218 = vsel %vm183, %v177, 0
        %v221 = vsel %vm183, %v182, 0
        %223 = vmatprep.subr.mxu0 0.0
        %224 = vmatpush1.xpose.msra.mxu0 %v221
        %225 = vmatprep.subr.mxu0 0.0
        %226 = vmatpush1.xpose.msra.mxu0 0.0
        %227 = vmatprep.subr.mxu0 0.0
        %228 = vmatpush1.xpose.msra.mxu0 0.0
        %229 = vmatprep.subr.mxu0 0.0
        %230 = vmatpush1.xpose.msra.mxu0 0.0
        %231 = vmatprep.subr.mxu0 0.0
        %232 = vmatpush1.xpose.msra.mxu0 0.0
        %233 = vmatprep.subr.mxu0 0.0
        %234 = vmatpush1.xpose.msra.mxu0 0.0
        %235 = vmatprep.subr.mxu0 0.0
        %236 = vmatpush1.xpose.msra.mxu0 0.0
        %237 = vmatprep.subr.mxu0 0.0
        %238 = vmatpush1.xpose.msra.mxu0 0.0
        %239 = vmatprep.subr.mxu0 0.0
        %240 = vmatpush1.xpose.msra.mxu0 0.0
        %241 = vmatprep.subr.mxu0 0.0
        %242 = vmatpush1.xpose.msra.mxu0 0.0
        %243 = vmatprep.subr.mxu0 0.0
        %244 = vmatpush1.xpose.msra.mxu0 0.0
        %245 = vmatprep.subr.mxu0 0.0
        %246 = vmatpush1.xpose.msra.mxu0 0.0
        %247 = vmatprep.subr.mxu0 0.0
        %248 = vmatpush1.xpose.msra.mxu0 0.0
        %249 = vmatprep.subr.mxu0 0.0
        %250 = vmatpush1.xpose.msra.mxu0 0.0
        %251 = vmatprep.subr.mxu0 0.0
        %252 = vmatpush1.xpose.msra.mxu0 0.0
        %253 = vmatprep.subr.mxu0 0.0
        %254 = vmatpush1.xpose.msra.mxu0 0.0
        %255 = vmatprep.subr.mxu0 0.0
        %256 = vmatpush1.xpose.msra.mxu0 0.0
        %257 = vmatprep.subr.mxu0 0.0
        %258 = vmatpush1.xpose.msra.mxu0 0.0
        %259 = vmatprep.subr.mxu0 0.0
        %260 = vmatpush1.xpose.msra.mxu0 0.0
        %261 = vmatprep.subr.mxu0 0.0
        %262 = vmatpush1.xpose.msra.mxu0 0.0
        %263 = vmatprep.subr.mxu0 0.0
        %264 = vmatpush1.xpose.msra.mxu0 0.0
        %265 = vmatprep.subr.mxu0 0.0
        %266 = vmatpush1.xpose.msra.mxu0 0.0
        %267 = vmatprep.subr.mxu0 0.0
        %268 = vmatpush1.xpose.msra.mxu0 0.0
        %269 = vmatprep.subr.mxu0 0.0
        %270 = vmatpush1.xpose.msra.mxu0 0.0
        %271 = vmatprep.subr.mxu0 0.0
        %272 = vmatpush1.xpose.msra.mxu0 0.0
        %273 = vmatprep.subr.mxu0 0.0
        %274 = vmatpush1.xpose.msra.mxu0 0.0
        %275 = vmatprep.subr.mxu0 0.0
        %276 = vmatpush1.xpose.msra.mxu0 0.0
        %277 = vmatprep.subr.mxu0 0.0
        %278 = vmatpush1.xpose.msra.mxu0 0.0
        %279 = vmatprep.subr.mxu0 0.0
        %280 = vmatpush1.xpose.msra.mxu0 0.0
        %281 = vmatprep.subr.mxu0 0.0
        %282 = vmatpush1.xpose.msra.mxu0 0.0
        %283 = vmatprep.subr.mxu0 0.0
        %284 = vmatpush1.xpose.msra.mxu0 0.0
        %285 = vmatprep.subr.mxu0 0.0
        %286 = vmatpush1.xpose.msra.mxu0 0.0
        %287 = vmatprep.mubr.f32.mxu0 0.0
        %288 = vmatmul.mubr.f32.gmra.mrb[0].mxu0 %v185
        %v289 = vpop.f32.mrb[0].mxu0
        %v290 = vadd.f32 0.0, %v289
        %v291 = vpop.f32.mrb[0].mxu0
        %292 = vmatprep.mubr.f32.mxu0 0.0
        %293 = vmatmul.mubr.f32.gmra.mrb[0].mxu0 %v188
        %v294 = vpop.f32.mrb[0].mxu0
        %v295 = vadd.f32 0.0, %v294
        %v296 = vpop.f32.mrb[0].mxu0
        %297 = vmatprep.mubr.f32.mxu0 0.0
        %298 = vmatmul.mubr.f32.gmra.mrb[0].mxu0 %v191
        %v299 = vpop.f32.mrb[0].mxu0
        %v300 = vadd.f32 0.0, %v299
        %v301 = vpop.f32.mrb[0].mxu0
        %302 = vmatprep.mubr.f32.mxu0 0.0
        %303 = vmatmul.mubr.f32.gmra.mrb[0].mxu0 %v194
        %v304 = vpop.f32.mrb[0].mxu0
        %v305 = vadd.f32 0.0, %v304
        %v306 = vpop.f32.mrb[0].mxu0
        %307 = vmatprep.mubr.f32.mxu0 0.0
        %308 = vmatmul.mubr.f32.gmra.mrb[0].mxu0 %v197
        %v309 = vpop.f32.mrb[0].mxu0
        %v310 = vadd.f32 0.0, %v309
        %v311 = vpop.f32.mrb[0].mxu0
        %312 = vmatprep.mubr.f32.mxu0 0.0
        %313 = vmatmul.mubr.f32.gmra.mrb[0].mxu0 %v200
        %v314 = vpop.f32.mrb[0].mxu0
        %v315 = vadd.f32 0.0, %v314
        %v316 = vpop.f32.mrb[0].mxu0
        %317 = vmatprep.mubr.f32.mxu0 0.0
        %318 = vmatmul.mubr.f32.gmra.mrb[0].mxu0 %v203
        %v319 = vpop.f32.mrb[0].mxu0
        %v320 = vadd.f32 0.0, %v319
        %v321 = vpop.f32.mrb[0].mxu0
        %322 = vmatprep.mubr.f32.mxu0 0.0
        %323 = vmatmul.mubr.f32.gmra.mrb[0].mxu0 %v206
        %v324 = vpop.f32.mrb[0].mxu0
        %v325 = vadd.f32 0.0, %v324
        %v326 = vpop.f32.mrb[0].mxu0
        %327 = vmatprep.mubr.f32.mxu0 0.0
        %328 = vmatmul.mubr.f32.gmra.mrb[0].mxu0 %v209
        %v329 = vpop.f32.mrb[0].mxu0
        %v330 = vadd.f32 0.0, %v329
        %v331 = vpop.f32.mrb[0].mxu0
        %332 = vmatprep.mubr.f32.mxu0 0.0
        %333 = vmatmul.mubr.f32.gmra.mrb[0].mxu0 %v212
        %v334 = vpop.f32.mrb[0].mxu0
        %v335 = vadd.f32 0.0, %v334
        %v336 = vpop.f32.mrb[0].mxu0
        %337 = vmatprep.mubr.f32.mxu0 0.0
        %338 = vmatmul.mubr.f32.gmra.mrb[0].mxu0 %v215
        %v339 = vpop.f32.mrb[0].mxu0
        %v340 = vadd.f32 0.0, %v339
        %v341 = vpop.f32.mrb[0].mxu0
        %342 = vmatprep.mubr.f32.mxu0 0.0
        %343 = vmatmul.mubr.f32.gmra.mrb[0].mxu0 %v218
        %v344 = vpop.f32.mrb[0].mxu0
        %v345 = vadd.f32 0.0, %v344
        %v346 = vpop.f32.mrb[0].mxu0
        %347 = vdwg.mxu0
        %v348 = vlaneseq
        %v349 = vshrl.u32 %v348, 7
        %v350 = vlaneseq
        %v351 = vand.u32 %v350, 127
        %vm352 = vcmp.le.s32.totalorder %v351, %v349
        %353 = vxpose.xlu0.b32.start [1/16] %v290, 128
        %354 = vxpose.xlu0.b32.cont [2/16] 0.0, 128
        %355 = vxpose.xlu0.b32.cont [3/16] 0.0, 128
        %356 = vxpose.xlu0.b32.cont [4/16] 0.0, 128
        %357 = vxpose.xlu0.b32.cont [5/16] 0.0, 128
        %358 = vxpose.xlu0.b32.cont [6/16] 0.0, 128
        %359 = vxpose.xlu0.b32.cont [7/16] 0.0, 128
        %360 = vxpose.xlu0.b32.cont [8/16] 0.0, 128
        %361 = vxpose.xlu0.b32.cont [9/16] 0.0, 128
        %362 = vxpose.xlu0.b32.cont [10/16] 0.0, 128
        %363 = vxpose.xlu0.b32.cont [11/16] 0.0, 128
        %364 = vxpose.xlu0.b32.cont [12/16] 0.0, 128
        %365 = vxpose.xlu0.b32.cont [13/16] 0.0, 128
        %366 = vxpose.xlu0.b32.cont [14/16] 0.0, 128
        %367 = vxpose.xlu0.b32.cont [15/16] 0.0, 128
        %368 = vxpose.xlu0.b32.end [16/16] 0.0, 128
        %v369 = vpop.trf.xlu0
        %v370 = vpop.trf.xlu0
        %v371 = vpop.trf.xlu0
        %v372 = vpop.trf.xlu0
        %v373 = vpop.trf.xlu0
        %v374 = vpop.trf.xlu0
        %v375 = vpop.trf.xlu0
        %v376 = vpop.trf.xlu0
        %v377 = vpop.trf.xlu0
        %v378 = vpop.trf.xlu0
        %v379 = vpop.trf.xlu0
        %v380 = vpop.trf.xlu0
        %v381 = vpop.trf.xlu0
        %v382 = vpop.trf.xlu0
        %v383 = vpop.trf.xlu0
        %v384 = vpop.trf.xlu0
        %vm385 = vcmask 64512
        %v387 = vsel %vm385, %v369, 0
        %389 = vmatprep.subr.mxu0 0.0
        %390 = vmatpush1.msra.mxu0 %v310
        %391 = vmatprep.subr.mxu0 0.0
        %392 = vmatpush1.msra.mxu0 0.0
        %393 = vmatprep.subr.mxu0 0.0
        %394 = vmatpush1.msra.mxu0 0.0
        %395 = vmatprep.subr.mxu0 0.0
        %396 = vmatpush1.msra.mxu0 0.0
        %397 = vmatprep.subr.mxu0 0.0
        %398 = vmatpush1.msra.mxu0 0.0
        %399 = vmatprep.subr.mxu0 0.0
        %400 = vmatpush1.msra.mxu0 0.0
        %401 = vmatprep.subr.mxu0 0.0
        %402 = vmatpush1.msra.mxu0 0.0
        %403 = vmatprep.subr.mxu0 0.0
        %404 = vmatpush1.msra.mxu0 0.0
        %405 = vmatprep.subr.mxu0 0.0
        %406 = vmatpush1.msra.mxu0 0.0
        %407 = vmatprep.subr.mxu0 0.0
        %408 = vmatpush1.msra.mxu0 0.0
        %409 = vmatprep.subr.mxu0 0.0
        %410 = vmatpush1.msra.mxu0 0.0
        %411 = vmatprep.subr.mxu0 0.0
        %412 = vmatpush1.msra.mxu0 0.0
        %413 = vmatprep.subr.mxu0 0.0
        %414 = vmatpush1.msra.mxu0 0.0
        %415 = vmatprep.subr.mxu0 0.0
        %416 = vmatpush1.msra.mxu0 0.0
        %417 = vmatprep.subr.mxu0 0.0
        %418 = vmatpush1.msra.mxu0 0.0
        %419 = vmatprep.subr.mxu0 0.0
        %420 = vmatpush1.msra.mxu0 0.0
        %421 = vmatprep.subr.mxu0 0.0
        %422 = vmatpush1.msra.mxu0 0.0
        %423 = vmatprep.subr.mxu0 0.0
        %424 = vmatpush1.msra.mxu0 0.0
        %425 = vmatprep.subr.mxu0 0.0
        %426 = vmatpush1.msra.mxu0 0.0
        %427 = vmatprep.subr.mxu0 0.0
        %428 = vmatpush1.msra.mxu0 0.0
        %429 = vmatprep.subr.mxu0 0.0
        %430 = vmatpush1.msra.mxu0 0.0
        %431 = vmatprep.subr.mxu0 0.0
        %432 = vmatpush1.msra.mxu0 0.0
        %433 = vmatprep.subr.mxu0 0.0
        %434 = vmatpush1.msra.mxu0 0.0
        %435 = vmatprep.subr.mxu0 0.0
        %436 = vmatpush1.msra.mxu0 0.0
        %437 = vmatprep.subr.mxu0 0.0
        %438 = vmatpush1.msra.mxu0 0.0
        %439 = vmatprep.subr.mxu0 0.0
        %440 = vmatpush1.msra.mxu0 0.0
        %441 = vmatprep.subr.mxu0 0.0
        %442 = vmatpush1.msra.mxu0 0.0
        %443 = vmatprep.subr.mxu0 0.0
        %444 = vmatpush1.msra.mxu0 0.0
        %445 = vmatprep.subr.mxu0 0.0
        %446 = vmatpush1.msra.mxu0 0.0
        %447 = vmatprep.subr.mxu0 0.0
        %448 = vmatpush1.msra.mxu0 0.0
        %449 = vmatprep.subr.mxu0 0.0
        %450 = vmatpush1.msra.mxu0 0.0
        %451 = vmatprep.subr.mxu0 0.0
        %452 = vmatpush1.msra.mxu0 0.0
        %453 = vmatprep.mubr.f32.mxu0 0.0
        %454 = vmatmul.mubr.f32.gmra.mrb[0].mxu0 %v387
        %v455 = vpop.f32.mrb[0].mxu0
        %v456 = vadd.f32 0.0, %v455
        %v457 = vpop.f32.mrb[0].mxu0
        %458 = vdwg.mxu0
        %v459 = vmul.f32 %v456, 0.35355338
        %v460 = vsel %vm352, %v459, -3.5355338e+09
        %v461 = vsel %vm385, %v460, -inf
        %462 = vmax.xlane.f32.xlu0 %v461
        %v463 = vpop.xlane.xlu0 %462
        %v464 = vsub.f32 %v460, %v463
        %v465 = vmul.f32 %v464, 1.442695
        %v466 = vpow.pop %v465
        %v467 = vsel %vm385, %v466, 0.0
        %468 = vadd.xlane.f32.xlu0 %v467
        %v469 = vpop.xlane.xlu0 %468
        %v471 = vsel %vm385, %v466, 0
        %v474 = vsel %vm385, %v330, 0
        %476 = vmatprep.subr.mxu0 0.0
        %477 = vmatpush1.xpose.msra.mxu0 %v474
        %478 = vmatprep.subr.mxu0 0.0
        %479 = vmatpush1.xpose.msra.mxu0 0.0
        %480 = vmatprep.subr.mxu0 0.0
        %481 = vmatpush1.xpose.msra.mxu0 0.0
        %482 = vmatprep.subr.mxu0 0.0
        %483 = vmatpush1.xpose.msra.mxu0 0.0
        %484 = vmatprep.subr.mxu0 0.0
        %485 = vmatpush1.xpose.msra.mxu0 0.0
        %486 = vmatprep.subr.mxu0 0.0
        %487 = vmatpush1.xpose.msra.mxu0 0.0
        %488 = vmatprep.subr.mxu0 0.0
        %489 = vmatpush1.xpose.msra.mxu0 0.0
        %490 = vmatprep.subr.mxu0 0.0
        %491 = vmatpush1.xpose.msra.mxu0 0.0
        %492 = vmatprep.subr.mxu0 0.0
        %493 = vmatpush1.xpose.msra.mxu0 0.0
        %494 = vmatprep.subr.mxu0 0.0
        %495 = vmatpush1.xpose.msra.mxu0 0.0
        %496 = vmatprep.subr.mxu0 0.0
        %497 = vmatpush1.xpose.msra.mxu0 0.0
        %498 = vmatprep.subr.mxu0 0.0
        %499 = vmatpush1.xpose.msra.mxu0 0.0
        %500 = vmatprep.subr.mxu0 0.0
        %501 = vmatpush1.xpose.msra.mxu0 0.0
        %502 = vmatprep.subr.mxu0 0.0
        %503 = vmatpush1.xpose.msra.mxu0 0.0
        %504 = vmatprep.subr.mxu0 0.0
        %505 = vmatpush1.xpose.msra.mxu0 0.0
        %506 = vmatprep.subr.mxu0 0.0
        %507 = vmatpush1.xpose.msra.mxu0 0.0
        %508 = vmatprep.subr.mxu0 0.0
        %509 = vmatpush1.xpose.msra.mxu0 0.0
        %510 = vmatprep.subr.mxu0 0.0
        %511 = vmatpush1.xpose.msra.mxu0 0.0
        %512 = vmatprep.subr.mxu0 0.0
        %513 = vmatpush1.xpose.msra.mxu0 0.0
        %514 = vmatprep.subr.mxu0 0.0
        %515 = vmatpush1.xpose.msra.mxu0 0.0
        %516 = vmatprep.subr.mxu0 0.0
        %517 = vmatpush1.xpose.msra.mxu0 0.0
        %518 = vmatprep.subr.mxu0 0.0
        %519 = vmatpush1.xpose.msra.mxu0 0.0
        %520 = vmatprep.subr.mxu0 0.0
        %521 = vmatpush1.xpose.msra.mxu0 0.0
        %522 = vmatprep.subr.mxu0 0.0
        %523 = vmatpush1.xpose.msra.mxu0 0.0
        %524 = vmatprep.subr.mxu0 0.0
        %525 = vmatpush1.xpose.msra.mxu0 0.0
        %526 = vmatprep.subr.mxu0 0.0
        %527 = vmatpush1.xpose.msra.mxu0 0.0
        %528 = vmatprep.subr.mxu0 0.0
        %529 = vmatpush1.xpose.msra.mxu0 0.0
        %530 = vmatprep.subr.mxu0 0.0
        %531 = vmatpush1.xpose.msra.mxu0 0.0
        %532 = vmatprep.subr.mxu0 0.0
        %533 = vmatpush1.xpose.msra.mxu0 0.0
        %534 = vmatprep.subr.mxu0 0.0
        %535 = vmatpush1.xpose.msra.mxu0 0.0
        %536 = vmatprep.subr.mxu0 0.0
        %537 = vmatpush1.xpose.msra.mxu0 0.0
        %538 = vmatprep.subr.mxu0 0.0
        %539 = vmatpush1.xpose.msra.mxu0 0.0
        %540 = vmatprep.mubr.f32.mxu0 0.0
        %541 = vmatmul.mubr.f32.gmra.mrb[0].mxu0 %v471
        %v542 = vpop.f32.mrb[0].mxu0
        %v543 = vadd.f32 0.0, %v542
        %v544 = vpop.f32.mrb[0].mxu0
        %545 = vdwg.mxu0
        %v546 = vrcp.pop %v469
        %v547 = vmul.f32 %v543, %v546
        %548 = vxpose.xlu0.b32.start [1/16] %v295, 128
        %549 = vxpose.xlu0.b32.cont [2/16] 0.0, 128
        %550 = vxpose.xlu0.b32.cont [3/16] 0.0, 128
        %551 = vxpose.xlu0.b32.cont [4/16] 0.0, 128
        %552 = vxpose.xlu0.b32.cont [5/16] 0.0, 128
        %553 = vxpose.xlu0.b32.cont [6/16] 0.0, 128
        %554 = vxpose.xlu0.b32.cont [7/16] 0.0, 128
        %555 = vxpose.xlu0.b32.cont [8/16] 0.0, 128
        %556 = vxpose.xlu0.b32.cont [9/16] 0.0, 128
        %557 = vxpose.xlu0.b32.cont [10/16] 0.0, 128
        %558 = vxpose.xlu0.b32.cont [11/16] 0.0, 128
        %559 = vxpose.xlu0.b32.cont [12/16] 0.0, 128
        %560 = vxpose.xlu0.b32.cont [13/16] 0.0, 128
        %561 = vxpose.xlu0.b32.cont [14/16] 0.0, 128
        %562 = vxpose.xlu0.b32.cont [15/16] 0.0, 128
        %563 = vxpose.xlu0.b32.end [16/16] 0.0, 128
        %v564 = vpop.trf.xlu0
        %v565 = vpop.trf.xlu0
        %v566 = vpop.trf.xlu0
        %v567 = vpop.trf.xlu0
        %v568 = vpop.trf.xlu0
        %v569 = vpop.trf.xlu0
        %v570 = vpop.trf.xlu0
        %v571 = vpop.trf.xlu0
        %v572 = vpop.trf.xlu0
        %v573 = vpop.trf.xlu0
        %v574 = vpop.trf.xlu0
        %v575 = vpop.trf.xlu0
        %v576 = vpop.trf.xlu0
        %v577 = vpop.trf.xlu0
        %v578 = vpop.trf.xlu0
        %v579 = vpop.trf.xlu0
        %v581 = vsel %vm385, %v564, 0
        %583 = vmatprep.subr.mxu0 0.0
        %584 = vmatpush1.msra.mxu0 %v315
        %585 = vmatprep.subr.mxu0 0.0
        %586 = vmatpush1.msra.mxu0 0.0
        %587 = vmatprep.subr.mxu0 0.0
        %588 = vmatpush1.msra.mxu0 0.0
        %589 = vmatprep.subr.mxu0 0.0
        %590 = vmatpush1.msra.mxu0 0.0
        %591 = vmatprep.subr.mxu0 0.0
        %592 = vmatpush1.msra.mxu0 0.0
        %593 = vmatprep.subr.mxu0 0.0
        %594 = vmatpush1.msra.mxu0 0.0
        %595 = vmatprep.subr.mxu0 0.0
        %596 = vmatpush1.msra.mxu0 0.0
        %597 = vmatprep.subr.mxu0 0.0
        %598 = vmatpush1.msra.mxu0 0.0
        %599 = vmatprep.subr.mxu0 0.0
        %600 = vmatpush1.msra.mxu0 0.0
        %601 = vmatprep.subr.mxu0 0.0
        %602 = vmatpush1.msra.mxu0 0.0
        %603 = vmatprep.subr.mxu0 0.0
        %604 = vmatpush1.msra.mxu0 0.0
        %605 = vmatprep.subr.mxu0 0.0
        %606 = vmatpush1.msra.mxu0 0.0
        %607 = vmatprep.subr.mxu0 0.0
        %608 = vmatpush1.msra.mxu0 0.0
        %609 = vmatprep.subr.mxu0 0.0
        %610 = vmatpush1.msra.mxu0 0.0
        %611 = vmatprep.subr.mxu0 0.0
        %612 = vmatpush1.msra.mxu0 0.0
        %613 = vmatprep.subr.mxu0 0.0
        %614 = vmatpush1.msra.mxu0 0.0
        %615 = vmatprep.subr.mxu0 0.0
        %616 = vmatpush1.msra.mxu0 0.0
        %617 = vmatprep.subr.mxu0 0.0
        %618 = vmatpush1.msra.mxu0 0.0
        %619 = vmatprep.subr.mxu0 0.0
        %620 = vmatpush1.msra.mxu0 0.0
        %621 = vmatprep.subr.mxu0 0.0
        %622 = vmatpush1.msra.mxu0 0.0
        %623 = vmatprep.subr.mxu0 0.0
        %624 = vmatpush1.msra.mxu0 0.0
        %625 = vmatprep.subr.mxu0 0.0
        %626 = vmatpush1.msra.mxu0 0.0
        %627 = vmatprep.subr.mxu0 0.0
        %628 = vmatpush1.msra.mxu0 0.0
        %629 = vmatprep.subr.mxu0 0.0
        %630 = vmatpush1.msra.mxu0 0.0
        %631 = vmatprep.subr.mxu0 0.0
        %632 = vmatpush1.msra.mxu0 0.0
        %633 = vmatprep.subr.mxu0 0.0
        %634 = vmatpush1.msra.mxu0 0.0
        %635 = vmatprep.subr.mxu0 0.0
        %636 = vmatpush1.msra.mxu0 0.0
        %637 = vmatprep.subr.mxu0 0.0
        %638 = vmatpush1.msra.mxu0 0.0
        %639 = vmatprep.subr.mxu0 0.0
        %640 = vmatpush1.msra.mxu0 0.0
        %641 = vmatprep.subr.mxu0 0.0
        %642 = vmatpush1.msra.mxu0 0.0
        %643 = vmatprep.subr.mxu0 0.0
        %644 = vmatpush1.msra.mxu0 0.0
        %645 = vmatprep.subr.mxu0 0.0
        %646 = vmatpush1.msra.mxu0 0.0
        %647 = vmatprep.mubr.f32.mxu0 0.0
        %648 = vmatmul.mubr.f32.gmra.mrb[0].mxu0 %v581
        %v649 = vpop.f32.mrb[0].mxu0
        %v650 = vadd.f32 0.0, %v649
        %v651 = vpop.f32.mrb[0].mxu0
        %652 = vdwg.mxu0
        %v653 = vmul.f32 %v650, 0.35355338
        %v654 = vsel %vm352, %v653, -3.5355338e+09
        %v655 = vsel %vm385, %v654, -inf
        %656 = vmax.xlane.f32.xlu0 %v655
        %v657 = vpop.xlane.xlu0 %656
        %v658 = vsub.f32 %v654, %v657
        %v659 = vmul.f32 %v658, 1.442695
        %v660 = vpow.pop %v659
        %v661 = vsel %vm385, %v660, 0.0
        %662 = vadd.xlane.f32.xlu0 %v661
        %v663 = vpop.xlane.xlu0 %662
        %v665 = vsel %vm385, %v660, 0
        %v668 = vsel %vm385, %v335, 0
        %670 = vmatprep.subr.mxu0 0.0
        %671 = vmatpush1.xpose.msra.mxu0 %v668
        %672 = vmatprep.subr.mxu0 0.0
        %673 = vmatpush1.xpose.msra.mxu0 0.0
        %674 = vmatprep.subr.mxu0 0.0
        %675 = vmatpush1.xpose.msra.mxu0 0.0
        %676 = vmatprep.subr.mxu0 0.0
        %677 = vmatpush1.xpose.msra.mxu0 0.0
        %678 = vmatprep.subr.mxu0 0.0
        %679 = vmatpush1.xpose.msra.mxu0 0.0
        %680 = vmatprep.subr.mxu0 0.0
        %681 = vmatpush1.xpose.msra.mxu0 0.0
        %682 = vmatprep.subr.mxu0 0.0
        %683 = vmatpush1.xpose.msra.mxu0 0.0
        %684 = vmatprep.subr.mxu0 0.0
        %685 = vmatpush1.xpose.msra.mxu0 0.0
        %686 = vmatprep.subr.mxu0 0.0
        %687 = vmatpush1.xpose.msra.mxu0 0.0
        %688 = vmatprep.subr.mxu0 0.0
        %689 = vmatpush1.xpose.msra.mxu0 0.0
        %690 = vmatprep.subr.mxu0 0.0
        %691 = vmatpush1.xpose.msra.mxu0 0.0
        %692 = vmatprep.subr.mxu0 0.0
        %693 = vmatpush1.xpose.msra.mxu0 0.0
        %694 = vmatprep.subr.mxu0 0.0
        %695 = vmatpush1.xpose.msra.mxu0 0.0
        %696 = vmatprep.subr.mxu0 0.0
        %697 = vmatpush1.xpose.msra.mxu0 0.0
        %698 = vmatprep.subr.mxu0 0.0
        %699 = vmatpush1.xpose.msra.mxu0 0.0
        %700 = vmatprep.subr.mxu0 0.0
        %701 = vmatpush1.xpose.msra.mxu0 0.0
        %702 = vmatprep.subr.mxu0 0.0
        %703 = vmatpush1.xpose.msra.mxu0 0.0
        %704 = vmatprep.subr.mxu0 0.0
        %705 = vmatpush1.xpose.msra.mxu0 0.0
        %706 = vmatprep.subr.mxu0 0.0
        %707 = vmatpush1.xpose.msra.mxu0 0.0
        %708 = vmatprep.subr.mxu0 0.0
        %709 = vmatpush1.xpose.msra.mxu0 0.0
        %710 = vmatprep.subr.mxu0 0.0
        %711 = vmatpush1.xpose.msra.mxu0 0.0
        %712 = vmatprep.subr.mxu0 0.0
        %713 = vmatpush1.xpose.msra.mxu0 0.0
        %714 = vmatprep.subr.mxu0 0.0
        %715 = vmatpush1.xpose.msra.mxu0 0.0
        %716 = vmatprep.subr.mxu0 0.0
        %717 = vmatpush1.xpose.msra.mxu0 0.0
        %718 = vmatprep.subr.mxu0 0.0
        %719 = vmatpush1.xpose.msra.mxu0 0.0
        %720 = vmatprep.subr.mxu0 0.0
        %721 = vmatpush1.xpose.msra.mxu0 0.0
        %722 = vmatprep.subr.mxu0 0.0
        %723 = vmatpush1.xpose.msra.mxu0 0.0
        %724 = vmatprep.subr.mxu0 0.0
        %725 = vmatpush1.xpose.msra.mxu0 0.0
        %726 = vmatprep.subr.mxu0 0.0
        %727 = vmatpush1.xpose.msra.mxu0 0.0
        %728 = vmatprep.subr.mxu0 0.0
        %729 = vmatpush1.xpose.msra.mxu0 0.0
        %730 = vmatprep.subr.mxu0 0.0
        %731 = vmatpush1.xpose.msra.mxu0 0.0
        %732 = vmatprep.subr.mxu0 0.0
        %733 = vmatpush1.xpose.msra.mxu0 0.0
        %734 = vmatprep.mubr.f32.mxu0 0.0
        %735 = vmatmul.mubr.f32.gmra.mrb[0].mxu0 %v665
        %v736 = vpop.f32.mrb[0].mxu0
        %v737 = vadd.f32 0.0, %v736
        %v738 = vpop.f32.mrb[0].mxu0
        %739 = vdwg.mxu0
        %v740 = vrcp.pop %v663
        %v741 = vmul.f32 %v737, %v740
        %742 = vxpose.xlu0.b32.start [1/16] %v300, 128
        %743 = vxpose.xlu0.b32.cont [2/16] 0.0, 128
        %744 = vxpose.xlu0.b32.cont [3/16] 0.0, 128
        %745 = vxpose.xlu0.b32.cont [4/16] 0.0, 128
        %746 = vxpose.xlu0.b32.cont [5/16] 0.0, 128
        %747 = vxpose.xlu0.b32.cont [6/16] 0.0, 128
        %748 = vxpose.xlu0.b32.cont [7/16] 0.0, 128
        %749 = vxpose.xlu0.b32.cont [8/16] 0.0, 128
        %750 = vxpose.xlu0.b32.cont [9/16] 0.0, 128
        %751 = vxpose.xlu0.b32.cont [10/16] 0.0, 128
        %752 = vxpose.xlu0.b32.cont [11/16] 0.0, 128
        %753 = vxpose.xlu0.b32.cont [12/16] 0.0, 128
        %754 = vxpose.xlu0.b32.cont [13/16] 0.0, 128
        %755 = vxpose.xlu0.b32.cont [14/16] 0.0, 128
        %756 = vxpose.xlu0.b32.cont [15/16] 0.0, 128
        %757 = vxpose.xlu0.b32.end [16/16] 0.0, 128
        %v758 = vpop.trf.xlu0
        %v759 = vpop.trf.xlu0
        %v760 = vpop.trf.xlu0
        %v761 = vpop.trf.xlu0
        %v762 = vpop.trf.xlu0
        %v763 = vpop.trf.xlu0
        %v764 = vpop.trf.xlu0
        %v765 = vpop.trf.xlu0
        %v766 = vpop.trf.xlu0
        %v767 = vpop.trf.xlu0
        %v768 = vpop.trf.xlu0
        %v769 = vpop.trf.xlu0
        %v770 = vpop.trf.xlu0
        %v771 = vpop.trf.xlu0
        %v772 = vpop.trf.xlu0
        %v773 = vpop.trf.xlu0
        %v775 = vsel %vm385, %v758, 0
        %777 = vmatprep.subr.mxu0 0.0
        %778 = vmatpush1.msra.mxu0 %v320
        %779 = vmatprep.subr.mxu0 0.0
        %780 = vmatpush1.msra.mxu0 0.0
        %781 = vmatprep.subr.mxu0 0.0
        %782 = vmatpush1.msra.mxu0 0.0
        %783 = vmatprep.subr.mxu0 0.0
        %784 = vmatpush1.msra.mxu0 0.0
        %785 = vmatprep.subr.mxu0 0.0
        %786 = vmatpush1.msra.mxu0 0.0
        %787 = vmatprep.subr.mxu0 0.0
        %788 = vmatpush1.msra.mxu0 0.0
        %789 = vmatprep.subr.mxu0 0.0
        %790 = vmatpush1.msra.mxu0 0.0
        %791 = vmatprep.subr.mxu0 0.0
        %792 = vmatpush1.msra.mxu0 0.0
        %793 = vmatprep.subr.mxu0 0.0
        %794 = vmatpush1.msra.mxu0 0.0
        %795 = vmatprep.subr.mxu0 0.0
        %796 = vmatpush1.msra.mxu0 0.0
        %797 = vmatprep.subr.mxu0 0.0
        %798 = vmatpush1.msra.mxu0 0.0
        %799 = vmatprep.subr.mxu0 0.0
        %800 = vmatpush1.msra.mxu0 0.0
        %801 = vmatprep.subr.mxu0 0.0
        %802 = vmatpush1.msra.mxu0 0.0
        %803 = vmatprep.subr.mxu0 0.0
        %804 = vmatpush1.msra.mxu0 0.0
        %805 = vmatprep.subr.mxu0 0.0
        %806 = vmatpush1.msra.mxu0 0.0
        %807 = vmatprep.subr.mxu0 0.0
        %808 = vmatpush1.msra.mxu0 0.0
        %809 = vmatprep.subr.mxu0 0.0
        %810 = vmatpush1.msra.mxu0 0.0
        %811 = vmatprep.subr.mxu0 0.0
        %812 = vmatpush1.msra.mxu0 0.0
        %813 = vmatprep.subr.mxu0 0.0
        %814 = vmatpush1.msra.mxu0 0.0
        %815 = vmatprep.subr.mxu0 0.0
        %816 = vmatpush1.msra.mxu0 0.0
        %817 = vmatprep.subr.mxu0 0.0
        %818 = vmatpush1.msra.mxu0 0.0
        %819 = vmatprep.subr.mxu0 0.0
        %820 = vmatpush1.msra.mxu0 0.0
        %821 = vmatprep.subr.mxu0 0.0
        %822 = vmatpush1.msra.mxu0 0.0
        %823 = vmatprep.subr.mxu0 0.0
        %824 = vmatpush1.msra.mxu0 0.0
        %825 = vmatprep.subr.mxu0 0.0
        %826 = vmatpush1.msra.mxu0 0.0
        %827 = vmatprep.subr.mxu0 0.0
        %828 = vmatpush1.msra.mxu0 0.0
        %829 = vmatprep.subr.mxu0 0.0
        %830 = vmatpush1.msra.mxu0 0.0
        %831 = vmatprep.subr.mxu0 0.0
        %832 = vmatpush1.msra.mxu0 0.0
        %833 = vmatprep.subr.mxu0 0.0
        %834 = vmatpush1.msra.mxu0 0.0
        %835 = vmatprep.subr.mxu0 0.0
        %836 = vmatpush1.msra.mxu0 0.0
        %837 = vmatprep.subr.mxu0 0.0
        %838 = vmatpush1.msra.mxu0 0.0
        %839 = vmatprep.subr.mxu0 0.0
        %840 = vmatpush1.msra.mxu0 0.0
        %841 = vmatprep.mubr.f32.mxu0 0.0
        %842 = vmatmul.mubr.f32.gmra.mrb[0].mxu0 %v775
        %v843 = vpop.f32.mrb[0].mxu0
        %v844 = vadd.f32 0.0, %v843
        %v845 = vpop.f32.mrb[0].mxu0
        %846 = vdwg.mxu0
        %v847 = vmul.f32 %v844, 0.35355338
        %v848 = vsel %vm352, %v847, -3.5355338e+09
        %v849 = vsel %vm385, %v848, -inf
        %850 = vmax.xlane.f32.xlu0 %v849
        %v851 = vpop.xlane.xlu0 %850
        %v852 = vsub.f32 %v848, %v851
        %v853 = vmul.f32 %v852, 1.442695
        %v854 = vpow.pop %v853
        %v855 = vsel %vm385, %v854, 0.0
        %856 = vadd.xlane.f32.xlu0 %v855
        %v857 = vpop.xlane.xlu0 %856
        %v859 = vsel %vm385, %v854, 0
        %v862 = vsel %vm385, %v340, 0
        %864 = vmatprep.subr.mxu0 0.0
        %865 = vmatpush1.xpose.msra.mxu0 %v862
        %866 = vmatprep.subr.mxu0 0.0
        %867 = vmatpush1.xpose.msra.mxu0 0.0
        %868 = vmatprep.subr.mxu0 0.0
        %869 = vmatpush1.xpose.msra.mxu0 0.0
        %870 = vmatprep.subr.mxu0 0.0
        %871 = vmatpush1.xpose.msra.mxu0 0.0
        %872 = vmatprep.subr.mxu0 0.0
        %873 = vmatpush1.xpose.msra.mxu0 0.0
        %874 = vmatprep.subr.mxu0 0.0
        %875 = vmatpush1.xpose.msra.mxu0 0.0
        %876 = vmatprep.subr.mxu0 0.0
        %877 = vmatpush1.xpose.msra.mxu0 0.0
        %878 = vmatprep.subr.mxu0 0.0
        %879 = vmatpush1.xpose.msra.mxu0 0.0
        %880 = vmatprep.subr.mxu0 0.0
        %881 = vmatpush1.xpose.msra.mxu0 0.0
        %882 = vmatprep.subr.mxu0 0.0
        %883 = vmatpush1.xpose.msra.mxu0 0.0
        %884 = vmatprep.subr.mxu0 0.0
        %885 = vmatpush1.xpose.msra.mxu0 0.0
        %886 = vmatprep.subr.mxu0 0.0
        %887 = vmatpush1.xpose.msra.mxu0 0.0
        %888 = vmatprep.subr.mxu0 0.0
        %889 = vmatpush1.xpose.msra.mxu0 0.0
        %890 = vmatprep.subr.mxu0 0.0
        %891 = vmatpush1.xpose.msra.mxu0 0.0
        %892 = vmatprep.subr.mxu0 0.0
        %893 = vmatpush1.xpose.msra.mxu0 0.0
        %894 = vmatprep.subr.mxu0 0.0
        %895 = vmatpush1.xpose.msra.mxu0 0.0
        %896 = vmatprep.subr.mxu0 0.0
        %897 = vmatpush1.xpose.msra.mxu0 0.0
        %898 = vmatprep.subr.mxu0 0.0
        %899 = vmatpush1.xpose.msra.mxu0 0.0
        %900 = vmatprep.subr.mxu0 0.0
        %901 = vmatpush1.xpose.msra.mxu0 0.0
        %902 = vmatprep.subr.mxu0 0.0
        %903 = vmatpush1.xpose.msra.mxu0 0.0
        %904 = vmatprep.subr.mxu0 0.0
        %905 = vmatpush1.xpose.msra.mxu0 0.0
        %906 = vmatprep.subr.mxu0 0.0
        %907 = vmatpush1.xpose.msra.mxu0 0.0
        %908 = vmatprep.subr.mxu0 0.0
        %909 = vmatpush1.xpose.msra.mxu0 0.0
        %910 = vmatprep.subr.mxu0 0.0
        %911 = vmatpush1.xpose.msra.mxu0 0.0
        %912 = vmatprep.subr.mxu0 0.0
        %913 = vmatpush1.xpose.msra.mxu0 0.0
        %914 = vmatprep.subr.mxu0 0.0
        %915 = vmatpush1.xpose.msra.mxu0 0.0
        %916 = vmatprep.subr.mxu0 0.0
        %917 = vmatpush1.xpose.msra.mxu0 0.0
        %918 = vmatprep.subr.mxu0 0.0
        %919 = vmatpush1.xpose.msra.mxu0 0.0
        %920 = vmatprep.subr.mxu0 0.0
        %921 = vmatpush1.xpose.msra.mxu0 0.0
        %922 = vmatprep.subr.mxu0 0.0
        %923 = vmatpush1.xpose.msra.mxu0 0.0
        %924 = vmatprep.subr.mxu0 0.0
        %925 = vmatpush1.xpose.msra.mxu0 0.0
        %926 = vmatprep.subr.mxu0 0.0
        %927 = vmatpush1.xpose.msra.mxu0 0.0
        %928 = vmatprep.mubr.f32.mxu0 0.0
        %929 = vmatmul.mubr.f32.gmra.mrb[0].mxu0 %v859
        %v930 = vpop.f32.mrb[0].mxu0
        %v931 = vadd.f32 0.0, %v930
        %v932 = vpop.f32.mrb[0].mxu0
        %933 = vdwg.mxu0
        %v934 = vrcp.pop %v857
        %v935 = vmul.f32 %v931, %v934
        %936 = vxpose.xlu0.b32.start [1/16] %v305, 128
        %937 = vxpose.xlu0.b32.cont [2/16] 0.0, 128
        %938 = vxpose.xlu0.b32.cont [3/16] 0.0, 128
        %939 = vxpose.xlu0.b32.cont [4/16] 0.0, 128
        %940 = vxpose.xlu0.b32.cont [5/16] 0.0, 128
        %941 = vxpose.xlu0.b32.cont [6/16] 0.0, 128
        %942 = vxpose.xlu0.b32.cont [7/16] 0.0, 128
        %943 = vxpose.xlu0.b32.cont [8/16] 0.0, 128
        %944 = vxpose.xlu0.b32.cont [9/16] 0.0, 128
        %945 = vxpose.xlu0.b32.cont [10/16] 0.0, 128
        %946 = vxpose.xlu0.b32.cont [11/16] 0.0, 128
        %947 = vxpose.xlu0.b32.cont [12/16] 0.0, 128
        %948 = vxpose.xlu0.b32.cont [13/16] 0.0, 128
        %949 = vxpose.xlu0.b32.cont [14/16] 0.0, 128
        %950 = vxpose.xlu0.b32.cont [15/16] 0.0, 128
        %951 = vxpose.xlu0.b32.end [16/16] 0.0, 128
        %v952 = vpop.trf.xlu0
        %v953 = vpop.trf.xlu0
        %v954 = vpop.trf.xlu0
        %v955 = vpop.trf.xlu0
        %v956 = vpop.trf.xlu0
        %v957 = vpop.trf.xlu0
        %v958 = vpop.trf.xlu0
        %v959 = vpop.trf.xlu0
        %v960 = vpop.trf.xlu0
        %v961 = vpop.trf.xlu0
        %v962 = vpop.trf.xlu0
        %v963 = vpop.trf.xlu0
        %v964 = vpop.trf.xlu0
        %v965 = vpop.trf.xlu0
        %v966 = vpop.trf.xlu0
        %v967 = vpop.trf.xlu0
        %v969 = vsel %vm385, %v952, 0
        %971 = vmatprep.subr.mxu0 0.0
        %972 = vmatpush1.msra.mxu0 %v325
        %973 = vmatprep.subr.mxu0 0.0
        %974 = vmatpush1.msra.mxu0 0.0
        %975 = vmatprep.subr.mxu0 0.0
        %976 = vmatpush1.msra.mxu0 0.0
        %977 = vmatprep.subr.mxu0 0.0
        %978 = vmatpush1.msra.mxu0 0.0
        %979 = vmatprep.subr.mxu0 0.0
        %980 = vmatpush1.msra.mxu0 0.0
        %981 = vmatprep.subr.mxu0 0.0
        %982 = vmatpush1.msra.mxu0 0.0
        %983 = vmatprep.subr.mxu0 0.0
        %984 = vmatpush1.msra.mxu0 0.0
        %985 = vmatprep.subr.mxu0 0.0
        %986 = vmatpush1.msra.mxu0 0.0
        %987 = vmatprep.subr.mxu0 0.0
        %988 = vmatpush1.msra.mxu0 0.0
        %989 = vmatprep.subr.mxu0 0.0
        %990 = vmatpush1.msra.mxu0 0.0
        %991 = vmatprep.subr.mxu0 0.0
        %992 = vmatpush1.msra.mxu0 0.0
        %993 = vmatprep.subr.mxu0 0.0
        %994 = vmatpush1.msra.mxu0 0.0
        %995 = vmatprep.subr.mxu0 0.0
        %996 = vmatpush1.msra.mxu0 0.0
        %997 = vmatprep.subr.mxu0 0.0
        %998 = vmatpush1.msra.mxu0 0.0
        %999 = vmatprep.subr.mxu0 0.0
        %1000 = vmatpush1.msra.mxu0 0.0
        %1001 = vmatprep.subr.mxu0 0.0
        %1002 = vmatpush1.msra.mxu0 0.0
        %1003 = vmatprep.subr.mxu0 0.0
        %1004 = vmatpush1.msra.mxu0 0.0
        %1005 = vmatprep.subr.mxu0 0.0
        %1006 = vmatpush1.msra.mxu0 0.0
        %1007 = vmatprep.subr.mxu0 0.0
        %1008 = vmatpush1.msra.mxu0 0.0
        %1009 = vmatprep.subr.mxu0 0.0
        %1010 = vmatpush1.msra.mxu0 0.0
        %1011 = vmatprep.subr.mxu0 0.0
        %1012 = vmatpush1.msra.mxu0 0.0
        %1013 = vmatprep.subr.mxu0 0.0
        %1014 = vmatpush1.msra.mxu0 0.0
        %1015 = vmatprep.subr.mxu0 0.0
        %1016 = vmatpush1.msra.mxu0 0.0
        %1017 = vmatprep.subr.mxu0 0.0
        %1018 = vmatpush1.msra.mxu0 0.0
        %1019 = vmatprep.subr.mxu0 0.0
        %1020 = vmatpush1.msra.mxu0 0.0
        %1021 = vmatprep.subr.mxu0 0.0
        %1022 = vmatpush1.msra.mxu0 0.0
        %1023 = vmatprep.subr.mxu0 0.0
        %1024 = vmatpush1.msra.mxu0 0.0
        %1025 = vmatprep.subr.mxu0 0.0
        %1026 = vmatpush1.msra.mxu0 0.0
        %1027 = vmatprep.subr.mxu0 0.0
        %1028 = vmatpush1.msra.mxu0 0.0
        %1029 = vmatprep.subr.mxu0 0.0
        %1030 = vmatpush1.msra.mxu0 0.0
        %1031 = vmatprep.subr.mxu0 0.0
        %1032 = vmatpush1.msra.mxu0 0.0
        %1033 = vmatprep.subr.mxu0 0.0
        %1034 = vmatpush1.msra.mxu0 0.0
        %1035 = vmatprep.mubr.f32.mxu0 0.0
        %1036 = vmatmul.mubr.f32.gmra.mrb[0].mxu0 %v969
        %v1037 = vpop.f32.mrb[0].mxu0
        %v1038 = vadd.f32 0.0, %v1037
        %v1039 = vpop.f32.mrb[0].mxu0
        %1040 = vdwg.mxu0
        %v1041 = vmul.f32 %v1038, 0.35355338
        %v1042 = vsel %vm352, %v1041, -3.5355338e+09
        %v1043 = vsel %vm385, %v1042, -inf
        %1044 = vmax.xlane.f32.xlu0 %v1043
        %v1045 = vpop.xlane.xlu0 %1044
        %v1046 = vsub.f32 %v1042, %v1045
        %v1047 = vmul.f32 %v1046, 1.442695
        %v1048 = vpow.pop %v1047
        %v1049 = vsel %vm385, %v1048, 0.0
        %1050 = vadd.xlane.f32.xlu0 %v1049
        %v1051 = vpop.xlane.xlu0 %1050
        %v1053 = vsel %vm385, %v1048, 0
        %v1056 = vsel %vm385, %v345, 0
        %1058 = vmatprep.subr.mxu0 0.0
        %1059 = vmatpush1.xpose.msra.mxu0 %v1056
        %1060 = vmatprep.subr.mxu0 0.0
        %1061 = vmatpush1.xpose.msra.mxu0 0.0
        %1062 = vmatprep.subr.mxu0 0.0
        %1063 = vmatpush1.xpose.msra.mxu0 0.0
        %1064 = vmatprep.subr.mxu0 0.0
        %1065 = vmatpush1.xpose.msra.mxu0 0.0
        %1066 = vmatprep.subr.mxu0 0.0
        %1067 = vmatpush1.xpose.msra.mxu0 0.0
        %1068 = vmatprep.subr.mxu0 0.0
        %1069 = vmatpush1.xpose.msra.mxu0 0.0
        %1070 = vmatprep.subr.mxu0 0.0
        %1071 = vmatpush1.xpose.msra.mxu0 0.0
        %1072 = vmatprep.subr.mxu0 0.0
        %1073 = vmatpush1.xpose.msra.mxu0 0.0
        %1074 = vmatprep.subr.mxu0 0.0
        %1075 = vmatpush1.xpose.msra.mxu0 0.0
        %1076 = vmatprep.subr.mxu0 0.0
        %1077 = vmatpush1.xpose.msra.mxu0 0.0
        %1078 = vmatprep.subr.mxu0 0.0
        %1079 = vmatpush1.xpose.msra.mxu0 0.0
        %1080 = vmatprep.subr.mxu0 0.0
        %1081 = vmatpush1.xpose.msra.mxu0 0.0
        %1082 = vmatprep.subr.mxu0 0.0
        %1083 = vmatpush1.xpose.msra.mxu0 0.0
        %1084 = vmatprep.subr.mxu0 0.0
        %1085 = vmatpush1.xpose.msra.mxu0 0.0
        %1086 = vmatprep.subr.mxu0 0.0
        %1087 = vmatpush1.xpose.msra.mxu0 0.0
        %1088 = vmatprep.subr.mxu0 0.0
        %1089 = vmatpush1.xpose.msra.mxu0 0.0
        %1090 = vmatprep.subr.mxu0 0.0
        %1091 = vmatpush1.xpose.msra.mxu0 0.0
        %1092 = vmatprep.subr.mxu0 0.0
        %1093 = vmatpush1.xpose.msra.mxu0 0.0
        %1094 = vmatprep.subr.mxu0 0.0
        %1095 = vmatpush1.xpose.msra.mxu0 0.0
        %1096 = vmatprep.subr.mxu0 0.0
        %1097 = vmatpush1.xpose.msra.mxu0 0.0
        %1098 = vmatprep.subr.mxu0 0.0
        %1099 = vmatpush1.xpose.msra.mxu0 0.0
        %1100 = vmatprep.subr.mxu0 0.0
        %1101 = vmatpush1.xpose.msra.mxu0 0.0
        %1102 = vmatprep.subr.mxu0 0.0
        %1103 = vmatpush1.xpose.msra.mxu0 0.0
        %1104 = vmatprep.subr.mxu0 0.0
        %1105 = vmatpush1.xpose.msra.mxu0 0.0
        %1106 = vmatprep.subr.mxu0 0.0
        %1107 = vmatpush1.xpose.msra.mxu0 0.0
        %1108 = vmatprep.subr.mxu0 0.0
        %1109 = vmatpush1.xpose.msra.mxu0 0.0
        %1110 = vmatprep.subr.mxu0 0.0
        %1111 = vmatpush1.xpose.msra.mxu0 0.0
        %1112 = vmatprep.subr.mxu0 0.0
        %1113 = vmatpush1.xpose.msra.mxu0 0.0
        %1114 = vmatprep.subr.mxu0 0.0
        %1115 = vmatpush1.xpose.msra.mxu0 0.0
        %1116 = vmatprep.subr.mxu0 0.0
        %1117 = vmatpush1.xpose.msra.mxu0 0.0
        %1118 = vmatprep.subr.mxu0 0.0
        %1119 = vmatpush1.xpose.msra.mxu0 0.0
        %1120 = vmatprep.subr.mxu0 0.0
        %1121 = vmatpush1.xpose.msra.mxu0 0.0
        %1122 = vmatprep.mubr.f32.mxu0 0.0
        %1123 = vmatmul.mubr.f32.gmra.mrb[0].mxu0 %v1053
        %v1124 = vpop.f32.mrb[0].mxu0
        %v1125 = vadd.f32 0.0, %v1124
        %v1126 = vpop.f32.mrb[0].mxu0
        %1127 = vdwg.mxu0
        %v1128 = vrcp.pop %v1051
        %v1129 = vmul.f32 %v1125, %v1128
        %1131 = vrot.lane.b32.xlu0 %v741, 8
        %v1132 = vpop.permute.xlu0 %1131
        %1135 = vrot.lane.b32.xlu0 %v935, 16
        %v1136 = vpop.permute.xlu0 %1135
        %1139 = vrot.lane.b32.xlu0 %v1129, 24
        %v1140 = vpop.permute.xlu0 %1139
        %v1142 = vsel %vm385, %v547, %v1132
        %vm1143 = vcmask 130048
        %v1144 = vsel %vm1143, %v1142, %v1136
        %vm1145 = vcmask 195584
        %v1146 = vsel %vm1145, %v1144, %v1140
        %v1148 = vsel %vm183, %v1146, 0
        %v1151 = vsel %vm183, %v178, 0
        %v1154 = vsel %vm183, %v179, 0
        %v1157 = vsel %vm183, %v180, 0
        %v1160 = vsel %vm183, %v181, 0
        %1162 = vmatprep.subr.mxu0 0.0
        %1163 = vmatpush1.xpose.msra.mxu0 %v1151
        %1164 = vmatprep.subr.mxu0 0.0
        %1165 = vmatpush1.xpose.msra.mxu0 %v1154
        %1166 = vmatprep.subr.mxu0 0.0
        %1167 = vmatpush1.xpose.msra.mxu0 %v1157
        %1168 = vmatprep.subr.mxu0 0.0
        %1169 = vmatpush1.xpose.msra.mxu0 %v1160
        %1170 = vmatprep.subr.mxu0 0.0
        %1171 = vmatpush1.xpose.msra.mxu0 0.0
        %1172 = vmatprep.subr.mxu0 0.0
        %1173 = vmatpush1.xpose.msra.mxu0 0.0
        %1174 = vmatprep.subr.mxu0 0.0
        %1175 = vmatpush1.xpose.msra.mxu0 0.0
        %1176 = vmatprep.subr.mxu0 0.0
        %1177 = vmatpush1.xpose.msra.mxu0 0.0
        %1178 = vmatprep.subr.mxu0 0.0
        %1179 = vmatpush1.xpose.msra.mxu0 0.0
        %1180 = vmatprep.subr.mxu0 0.0
        %1181 = vmatpush1.xpose.msra.mxu0 0.0
        %1182 = vmatprep.subr.mxu0 0.0
        %1183 = vmatpush1.xpose.msra.mxu0 0.0
        %1184 = vmatprep.subr.mxu0 0.0
        %1185 = vmatpush1.xpose.msra.mxu0 0.0
        %1186 = vmatprep.subr.mxu0 0.0
        %1187 = vmatpush1.xpose.msra.mxu0 0.0
        %1188 = vmatprep.subr.mxu0 0.0
        %1189 = vmatpush1.xpose.msra.mxu0 0.0
        %1190 = vmatprep.subr.mxu0 0.0
        %1191 = vmatpush1.xpose.msra.mxu0 0.0
        %1192 = vmatprep.subr.mxu0 0.0
        %1193 = vmatpush1.xpose.msra.mxu0 0.0
        %1194 = vmatprep.subr.mxu0 0.0
        %1195 = vmatpush1.xpose.msra.mxu0 0.0
        %1196 = vmatprep.subr.mxu0 0.0
        %1197 = vmatpush1.xpose.msra.mxu0 0.0
        %1198 = vmatprep.subr.mxu0 0.0
        %1199 = vmatpush1.xpose.msra.mxu0 0.0
        %1200 = vmatprep.subr.mxu0 0.0
        %1201 = vmatpush1.xpose.msra.mxu0 0.0
        %1202 = vmatprep.subr.mxu0 0.0
        %1203 = vmatpush1.xpose.msra.mxu0 0.0
        %1204 = vmatprep.subr.mxu0 0.0
        %1205 = vmatpush1.xpose.msra.mxu0 0.0
        %1206 = vmatprep.subr.mxu0 0.0
        %1207 = vmatpush1.xpose.msra.mxu0 0.0
        %1208 = vmatprep.subr.mxu0 0.0
        %1209 = vmatpush1.xpose.msra.mxu0 0.0
        %1210 = vmatprep.subr.mxu0 0.0
        %1211 = vmatpush1.xpose.msra.mxu0 0.0
        %1212 = vmatprep.subr.mxu0 0.0
        %1213 = vmatpush1.xpose.msra.mxu0 0.0
        %1214 = vmatprep.subr.mxu0 0.0
        %1215 = vmatpush1.xpose.msra.mxu0 0.0
        %1216 = vmatprep.subr.mxu0 0.0
        %1217 = vmatpush1.xpose.msra.mxu0 0.0
        %1218 = vmatprep.subr.mxu0 0.0
        %1219 = vmatpush1.xpose.msra.mxu0 0.0
        %1220 = vmatprep.subr.mxu0 0.0
        %1221 = vmatpush1.xpose.msra.mxu0 0.0
        %1222 = vmatprep.subr.mxu0 0.0
        %1223 = vmatpush1.xpose.msra.mxu0 0.0
        %1224 = vmatprep.subr.mxu0 0.0
        %1225 = vmatpush1.xpose.msra.mxu0 0.0
        %1226 = vmatprep.mubr.f32.mxu0 0.0
        %1227 = vmatmul.mubr.f32.gmra.mrb[0].mxu0 %v1148
        %v1228 = vpop.f32.mrb[0].mxu0
        %v1229 = vadd.f32 0.0, %v1228
        %v1230 = vpop.f32.mrb[0].mxu0
        %1231 = vdwg.mxu0
        %1232 = vst.msk [vmem:[%s161] sm:$0xff] %vm183, %v1229
        %s1233 = sand.u32 %s93, 1
        %s1234 = scalar_lea.sflag [#allocation3], %s1233
        %s1235 = sand.u32 %s93, 1
        %s1236 = smul.addr %s1235, 8
        %s1237 = scalar_lea.vmem [#allocation2], %s1236
        // Predicated region
        $region33: #{tpu_custom_call.1} parent=31 // pred_check
          %p1238 = pneg %p103
        $region34: #{tpu_custom_call.1} parent=31 // pred_check_branch
          %1240 = sbr.rel (%p1238) target = $region36
        $region35: #{tpu_custom_call.1} parent=31 // pred_region
          %s1242 = ssub.s32 128, 128
          %1243 = vsyncadd %s1234, %s1242
          %s1244 = smul.addr %s17, 128
          %s1245 = scalar_lea.hbm %s3, %s1244
          %s1247 = sshll.u32 %s1237, 4
          %s1248 = int_to_ptr.vmem [resolvable:$true] %s1247
          %1250 = dma.vmem_to_hbm [thread:$0]  %s1248, 128, %s1245, %s1234
        $region36: #{tpu_custom_call.1} parent=31 // pred_fallthru
          _
      $region32: #{tpu_custom_call.1} parent=5 // pred_fallthru
        _
      %p1251 = scmp.le.s32.totalorder 2, %s12
      // Predicated region
      $region37: #{tpu_custom_call.1} parent=5 // pred_check
        %p1252 = pneg %p1251
      $region38: #{tpu_custom_call.1} parent=5 // pred_check_branch
        %1254 = sbr.rel (%p1252) target = $region40
      $region39: #{tpu_custom_call.1} parent=5 // pred_region
        %s1255 = ssub.s32 %s12, 2
        // Predicated region
        $region41: #{tpu_custom_call.1} parent=39 // pred_check
          %p1256 = pneg %p109
        $region42: #{tpu_custom_call.1} parent=39 // pred_check_branch
          %1258 = sbr.rel (%p1256) target = $region44
        $region43: #{tpu_custom_call.1} parent=39 // pred_region
          %s1259 = sand.u32 %s94, 1
          %s1260 = scalar_lea.sflag [#allocation3], %s1259
          %s1261 = sand.u32 %s94, 1
          %s1262 = smul.addr %s1261, 8
          %s1263 = scalar_lea.vmem [#allocation2], %s1262
          %1264 = dma.done %s1260, 128
        $region44: #{tpu_custom_call.1} parent=39 // pred_fallthru
          _
      $region40: #{tpu_custom_call.1} parent=5 // pred_fallthru
        _
    $region6: #{tpu_custom_call.1} parent=1 // loop_footer
      %s16 = sadd.s32 1, %s12
    $region7: #{tpu_custom_call.1} parent=1 // loop_footer_branch
      %11 = sbr.rel target = $region3
    $region8: #{tpu_custom_call.1} parent=1 // loop_exit
      _
    %1265 = vsyncpa [#allocation3], 1
    %s1266 = scalar_lea.sflag [#allocation3], 1
    %1267 = vsyncpa %s1266, 1

</llo_original>
